<compile_context>
chip_gen: v5e
topology: v5e:2x2
jax: 0.10.0
libtpu: 0.0.40
codegen_flags: <defaults>
</compile_context>

<pallas_src>
import numpy as np

import jax
import jax.numpy as jnp
from jax.experimental import pallas as pl
from jax.experimental.pallas import tpu as pltpu

_LANE = 128  # lane width for the padded final-layer output


# ---------------------------------------------------------------------------
# In-kernel math helpers (primitives with guaranteed Mosaic lowerings only).
# ---------------------------------------------------------------------------
def _erf(x):
    # Abramowitz & Stegun 7.1.26, |err| < 1.5e-7  ->  matches
    # torch.nn.GELU(approximate='none') to fp32 tolerance.
    a1, a2, a3, a4, a5 = (0.254829592, -0.284496736, 1.421413741,
                          -1.453152027, 1.061405429)
    p = 0.3275911
    ax = jnp.abs(x)
    t = 1.0 / (1.0 + p * ax)
    poly = ((((a5 * t + a4) * t + a3) * t + a2) * t + a1) * t
    y = 1.0 - poly * jnp.exp(-ax * ax)
    return jnp.where(x < 0.0, -y, y)


def _gelu_exact(x):
    return 0.5 * x * (1.0 + _erf(x * 0.7071067811865476))


# ---------------------------------------------------------------------------
# The single fused kernel: conv1 + conv2 + flatten + linear1 + linear2.
# All operands are 2-D; convs arrive pre-folded into dense matrices (m1, m2).
# ---------------------------------------------------------------------------
def _convnet2d_kernel(x_ref, m1_ref, b1_ref, m2_ref, b2_ref,
                      w3_ref, b3_ref, w4_ref, b4_ref, o_ref):
    h = x_ref[...]                                                   # (bm, Cin*HW)
    h = _gelu_exact(jnp.dot(h, m1_ref[...],
                            preferred_element_type=jnp.float32) + b1_ref[...])
    h = _gelu_exact(jnp.dot(h, m2_ref[...],
                            preferred_element_type=jnp.float32) + b2_ref[...])
    h = _gelu_exact(jnp.dot(h, w3_ref[...],
                            preferred_element_type=jnp.float32) + b3_ref[...])
    y = jnp.dot(h, w4_ref[...],
                preferred_element_type=jnp.float32) + b4_ref[...]    # (bm, 128)
    o_ref[...] = (1.0 / (1.0 + jnp.exp(-y))).astype(o_ref.dtype)     # sigmoid


def convnet2d_forward(prep, board):
    """board: NCHW (B, piece_dim, H, W) with H*W == board_size. Returns (B, 1)."""
    B = board.shape[0]
    x = board.reshape(B, -1).astype(jnp.float32)     # NCHW flatten: free bitcast
    k0 = x.shape[1]

    bm = B if B <= 512 else 512                      # single block for tiny batch
    grid = (pl.cdiv(B, bm),)

    weights = [prep[k] for k in ("m1", "b1", "m2", "b2", "w3", "b3", "w4", "b4")]
    weight_specs = [pl.BlockSpec(w.shape, lambda i: (0, 0)) for w in weights]

    out_pad = pl.pallas_call(
        _convnet2d_kernel,
        out_shape=jax.ShapeDtypeStruct((B, _LANE), jnp.float32),
        grid=grid,
        in_specs=[pl.BlockSpec((bm, k0), lambda i: (i, 0))] + weight_specs,
        out_specs=pl.BlockSpec((bm, _LANE), lambda i: (i, 0)),
        compiler_params=pltpu.CompilerParams(dimension_semantics=("parallel",)),
    )(x, *weights)

    return out_pad[:, :1]                            # true output is column 0


# ---------------------------------------------------------------------------
# One-time host-side parameter preparation (torch layouts -> fused matrices).
# ---------------------------------------------------------------------------
def prepare_params(params, H, W):
    HW = H * W

    def conv_as_dense(w):
        # w: (Cout, Cin, 3, 3) torch layout -> M: (Cin*HW, Cout*HW) such that
        # out_flat = in_flat @ M reproduces Conv2d(padding='same') on the
        # NCHW-flattened activation (index c*HW + h*W + w).
        w = np.asarray(w, np.float32)
        Cout, Cin, KH, KW = w.shape
        M = np.zeros((Cin * HW, Cout * HW), np.float32)
        ci = np.arange(Cin)
        co = np.arange(Cout)
        for h in range(H):
            for x in range(W):
                p = h * W + x
                for di in range(KH):
                    for dj in range(KW):
                        hh, ww = h + di - KH // 2, x + dj - KW // 2
                        if 0 <= hh < H and 0 <= ww < W:
                            q = hh * W + ww
                            M[np.ix_(ci * HW + q, co * HW + p)] += w[:, :, di, dj].T
        return M

    m1 = conv_as_dense(params["w1"])
    m2 = conv_as_dense(params["w2"])
    b1e = np.repeat(np.asarray(params["b1"], np.float32), HW)       # [c*HW+p] = b1[c]
    b2e = np.repeat(np.asarray(params["b2"], np.float32), HW)

    w3 = np.asarray(params["w3"], np.float32).T                     # (in, out)
    b3 = np.asarray(params["b3"], np.float32)

    w4t = np.asarray(params["w4"], np.float32).T                    # (hidden, 1)
    hidden = w4t.shape[0]
    w4p = np.zeros((hidden, _LANE), np.float32)                     # lane-dense pad
    w4p[:, :1] = w4t
    b4p = np.zeros((_LANE,), np.float32)
    b4p[0] = float(np.asarray(params["b4"], np.float32)[0])

    def as2d(v):
        return jnp.asarray(np.asarray(v, np.float32).reshape(1, -1))

    return {
        "m1": jnp.asarray(m1), "b1": as2d(b1e),
        "m2": jnp.asarray(m2), "b2": as2d(b2e),
        "w3": jnp.asarray(w3), "b3": as2d(b3),
        "w4": jnp.asarray(w4p), "b4": as2d(b4p),
    }


# ---------------------------------------------------------------------------
# Parameter init (PyTorch-default-style uniform, torch weight layouts).
# ---------------------------------------------------------------------------
def init_params(key, piece_dim, board_size):
    convolved_size = piece_dim * 4 * board_size
    hidden = convolved_size // 2
    ks = jax.random.split(key, 8)

    def u(k, shape, fan_in):
        bound = 1.0 / (fan_in ** 0.5)
        return jax.random.uniform(k, shape, jnp.float32, -bound, bound)

    return {
        "w1": u(ks[0], (2 * piece_dim, piece_dim, 3, 3), piece_dim * 9),
        "b1": u(ks[1], (2 * piece_dim,), piece_dim * 9),
        "w2": u(ks[2], (4 * piece_dim, 2 * piece_dim, 3, 3), 2 * piece_dim * 9),
        "b2": u(ks[3], (4 * piece_dim,), 2 * piece_dim * 9),
        "w3": u(ks[4], (hidden, convolved_size), convolved_size),   # torch (out, in)
        "b3": u(ks[5], (hidden,), convolved_size),
        "w4": u(ks[6], (1, hidden), hidden),
        "b4": u(ks[7], (1,), hidden),
    }


# ---------------------------------------------------------------------------
# Pure-JAX reference (for a correctness check against the fused kernel).
# ---------------------------------------------------------------------------
def _reference_forward(params, board):
    def conv(x, w, b):
        y = jax.lax.conv_general_dilated(
            x, w, (1, 1), "SAME", dimension_numbers=("NCHW", "OIHW", "NCHW"))
        return y + b.reshape(1, -1, 1, 1)

    x = jax.nn.gelu(conv(board, params["w1"], params["b1"]), approximate=False)
    x = jax.nn.gelu(conv(x, params["w2"], params["b2"]), approximate=False)
    x = x.reshape(x.shape[0], -1)
    x = jax.nn.gelu(x @ params["w3"].T + params["b3"], approximate=False)
    return jax.nn.sigmoid(x @ params["w4"].T + params["b4"])


if __name__ == "__main__":
    piece_dim = 4
    H = W = 4
    board_size = H * W          # 16 -> convolved_size = 256, hidden = 128
    batch = 2

    key = jax.random.PRNGKey(0)
    pkey, xkey = jax.random.split(key)
    params = init_params(pkey, piece_dim, board_size)
    prep = prepare_params(params, H, W)          # one-time host-side weight prep
    board = jax.random.normal(xkey, (batch, piece_dim, H, W), jnp.float32)

    fwd = jax.jit(convnet2d_forward)
    out = jax.block_until_ready(fwd(prep, board))

    assert out.shape == (batch, 1), out.shape
    assert out.dtype == jnp.float32
    assert bool(jnp.all((out >= 0.0) & (out <= 1.0)))

    ref = _reference_forward(params, board)
    np.testing.assert_allclose(np.asarray(out), np.asarray(ref), rtol=2e-3, atol=2e-3)

    print("KERNEL_OK")
</pallas_src>

<mosaic_0001>
module attributes {stable_mosaic.version = 11 : i64} {
  func.func @_convnet2d_kernel(%arg0: i32, %arg1: memref<2x64xf32, #tpu.memory_space<vmem>>, %arg2: memref<64x128xf32, #tpu.memory_space<vmem>>, %arg3: memref<1x128xf32, #tpu.memory_space<vmem>>, %arg4: memref<128x256xf32, #tpu.memory_space<vmem>>, %arg5: memref<1x256xf32, #tpu.memory_space<vmem>>, %arg6: memref<256x128xf32, #tpu.memory_space<vmem>>, %arg7: memref<1x128xf32, #tpu.memory_space<vmem>>, %arg8: memref<128x128xf32, #tpu.memory_space<vmem>>, %arg9: memref<1x128xf32, #tpu.memory_space<vmem>>, %arg10: memref<2x128xf32, #tpu.memory_space<vmem>>) attributes {dimension_semantics = [#tpu.dimension_semantics<parallel>], iteration_bounds = array<i64: 1>, scalar_prefetch = 0 : i64, scratch_operands = 0 : i64, tpu.core_type = #tpu.core_type<tc>, window_params = [{transform_indices = @transform_0, window_bounds = array<i64: 2, 64>}, {pipeline_mode = #tpu.pipeline_mode<synchronous>, transform_indices = @transform_1, window_bounds = array<i64: 64, 128>}, {pipeline_mode = #tpu.pipeline_mode<synchronous>, transform_indices = @transform_2, window_bounds = array<i64: 1, 128>}, {pipeline_mode = #tpu.pipeline_mode<synchronous>, transform_indices = @transform_3, window_bounds = array<i64: 128, 256>}, {pipeline_mode = #tpu.pipeline_mode<synchronous>, transform_indices = @transform_4, window_bounds = array<i64: 1, 256>}, {pipeline_mode = #tpu.pipeline_mode<synchronous>, transform_indices = @transform_5, window_bounds = array<i64: 256, 128>}, {pipeline_mode = #tpu.pipeline_mode<synchronous>, transform_indices = @transform_6, window_bounds = array<i64: 1, 128>}, {pipeline_mode = #tpu.pipeline_mode<synchronous>, transform_indices = @transform_7, window_bounds = array<i64: 128, 128>}, {pipeline_mode = #tpu.pipeline_mode<synchronous>, transform_indices = @transform_8, window_bounds = array<i64: 1, 128>}, {transform_indices = @transform_9, window_bounds = array<i64: 2, 128>}]} {
    %c0 = arith.constant 0 : index
    %c0_0 = arith.constant 0 : index
    %0 = vector.load %arg1[%c0, %c0_0] : memref<2x64xf32, #tpu.memory_space<vmem>>, vector<2x64xf32>
    %c0_1 = arith.constant 0 : index
    %c0_2 = arith.constant 0 : index
    %1 = vector.load %arg2[%c0_1, %c0_2] : memref<64x128xf32, #tpu.memory_space<vmem>>, vector<64x128xf32>
    %cst = arith.constant dense<0.000000e+00> : vector<2x128xf32>
    %2 = tpu.matmul %0, %1, %cst {dimension_numbers = #tpu.dot_dimension_numbers<[1], [0], [0], [1], [0, 0, 1, 1], [], []>} : vector<2x64xf32>, vector<64x128xf32>, vector<2x128xf32> -> vector<2x128xf32>
    %c0_3 = arith.constant 0 : index
    %c0_4 = arith.constant 0 : index
    %3 = vector.load %arg3[%c0_3, %c0_4] : memref<1x128xf32, #tpu.memory_space<vmem>>, vector<1x128xf32>
    %4 = vector.broadcast %3 : vector<1x128xf32> to vector<2x128xf32>
    %5 = arith.addf %2, %4 : vector<2x128xf32>
    %cst_5 = arith.constant 5.000000e-01 : f32
    %6 = vector.broadcast %cst_5 : f32 to vector<2x128xf32>
    %7 = arith.mulf %6, %5 : vector<2x128xf32>
    %cst_6 = arith.constant 0.707106769 : f32
    %8 = vector.broadcast %cst_6 : f32 to vector<2x128xf32>
    %9 = arith.mulf %5, %8 : vector<2x128xf32>
    %10 = math.absf %9 : vector<2x128xf32>
    %cst_7 = arith.constant 0.327591091 : f32
    %11 = vector.broadcast %cst_7 : f32 to vector<2x128xf32>
    %12 = arith.mulf %11, %10 : vector<2x128xf32>
    %cst_8 = arith.constant 1.000000e+00 : f32
    %13 = vector.broadcast %cst_8 : f32 to vector<2x128xf32>
    %14 = arith.addf %13, %12 : vector<2x128xf32>
    %cst_9 = arith.constant 1.000000e+00 : f32
    %15 = vector.broadcast %cst_9 : f32 to vector<2x128xf32>
    %16 = arith.divf %15, %14 : vector<2x128xf32>
    %cst_10 = arith.constant 1.06140542 : f32
    %17 = vector.broadcast %cst_10 : f32 to vector<2x128xf32>
    %18 = arith.mulf %17, %16 : vector<2x128xf32>
    %cst_11 = arith.constant -1.45315206 : f32
    %19 = vector.broadcast %cst_11 : f32 to vector<2x128xf32>
    %20 = arith.addf %18, %19 : vector<2x128xf32>
    %21 = arith.mulf %20, %16 : vector<2x128xf32>
    %cst_12 = arith.constant 1.42141378 : f32
    %22 = vector.broadcast %cst_12 : f32 to vector<2x128xf32>
    %23 = arith.addf %21, %22 : vector<2x128xf32>
    %24 = arith.mulf %23, %16 : vector<2x128xf32>
    %cst_13 = arith.constant -0.284496725 : f32
    %25 = vector.broadcast %cst_13 : f32 to vector<2x128xf32>
    %26 = arith.addf %24, %25 : vector<2x128xf32>
    %27 = arith.mulf %26, %16 : vector<2x128xf32>
    %cst_14 = arith.constant 0.254829586 : f32
    %28 = vector.broadcast %cst_14 : f32 to vector<2x128xf32>
    %29 = arith.addf %27, %28 : vector<2x128xf32>
    %30 = arith.mulf %29, %16 : vector<2x128xf32>
    %cst_15 = arith.constant 0.000000e+00 : f32
    %31 = vector.broadcast %cst_15 : f32 to vector<2x128xf32>
    %32 = arith.subf %31, %10 : vector<2x128xf32>
    %33 = arith.mulf %32, %10 : vector<2x128xf32>
    %34 = math.exp %33 : vector<2x128xf32>
    %35 = arith.mulf %30, %34 : vector<2x128xf32>
    %cst_16 = arith.constant 1.000000e+00 : f32
    %36 = vector.broadcast %cst_16 : f32 to vector<2x128xf32>
    %37 = arith.subf %36, %35 : vector<2x128xf32>
    %cst_17 = arith.constant 0.000000e+00 : f32
    %38 = vector.broadcast %cst_17 : f32 to vector<2x128xf32>
    %39 = arith.cmpf olt, %9, %38 : vector<2x128xf32>
    %cst_18 = arith.constant 0.000000e+00 : f32
    %40 = vector.broadcast %cst_18 : f32 to vector<2x128xf32>
    %41 = arith.subf %40, %37 : vector<2x128xf32>
    %42 = arith.select %39, %41, %37 : vector<2x128xi1>, vector<2x128xf32>
    %cst_19 = arith.constant 1.000000e+00 : f32
    %43 = vector.broadcast %cst_19 : f32 to vector<2x128xf32>
    %44 = arith.addf %43, %42 : vector<2x128xf32>
    %45 = arith.mulf %7, %44 : vector<2x128xf32>
    %c0_20 = arith.constant 0 : index
    %c0_21 = arith.constant 0 : index
    %46 = vector.load %arg4[%c0_20, %c0_21] : memref<128x256xf32, #tpu.memory_space<vmem>>, vector<128x256xf32>
    %cst_22 = arith.constant dense<0.000000e+00> : vector<2x256xf32>
    %47 = tpu.matmul %45, %46, %cst_22 {dimension_numbers = #tpu.dot_dimension_numbers<[1], [0], [0], [1], [0, 0, 1, 1], [], []>} : vector<2x128xf32>, vector<128x256xf32>, vector<2x256xf32> -> vector<2x256xf32>
    %c0_23 = arith.constant 0 : index
    %c0_24 = arith.constant 0 : index
    %48 = vector.load %arg5[%c0_23, %c0_24] : memref<1x256xf32, #tpu.memory_space<vmem>>, vector<1x256xf32>
    %49 = vector.broadcast %48 : vector<1x256xf32> to vector<2x256xf32>
    %50 = arith.addf %47, %49 : vector<2x256xf32>
    %cst_25 = arith.constant 5.000000e-01 : f32
    %51 = vector.broadcast %cst_25 : f32 to vector<2x256xf32>
    %52 = arith.mulf %51, %50 : vector<2x256xf32>
    %cst_26 = arith.constant 0.707106769 : f32
    %53 = vector.broadcast %cst_26 : f32 to vector<2x256xf32>
    %54 = arith.mulf %50, %53 : vector<2x256xf32>
    %55 = math.absf %54 : vector<2x256xf32>
    %cst_27 = arith.constant 0.327591091 : f32
    %56 = vector.broadcast %cst_27 : f32 to vector<2x256xf32>
    %57 = arith.mulf %56, %55 : vector<2x256xf32>
    %cst_28 = arith.constant 1.000000e+00 : f32
    %58 = vector.broadcast %cst_28 : f32 to vector<2x256xf32>
    %59 = arith.addf %58, %57 : vector<2x256xf32>
    %cst_29 = arith.constant 1.000000e+00 : f32
    %60 = vector.broadcast %cst_29 : f32 to vector<2x256xf32>
    %61 = arith.divf %60, %59 : vector<2x256xf32>
    %cst_30 = arith.constant 1.06140542 : f32
    %62 = vector.broadcast %cst_30 : f32 to vector<2x256xf32>
    %63 = arith.mulf %62, %61 : vector<2x256xf32>
    %cst_31 = arith.constant -1.45315206 : f32
    %64 = vector.broadcast %cst_31 : f32 to vector<2x256xf32>
    %65 = arith.addf %63, %64 : vector<2x256xf32>
    %66 = arith.mulf %65, %61 : vector<2x256xf32>
    %cst_32 = arith.constant 1.42141378 : f32
    %67 = vector.broadcast %cst_32 : f32 to vector<2x256xf32>
    %68 = arith.addf %66, %67 : vector<2x256xf32>
    %69 = arith.mulf %68, %61 : vector<2x256xf32>
    %cst_33 = arith.constant -0.284496725 : f32
    %70 = vector.broadcast %cst_33 : f32 to vector<2x256xf32>
    %71 = arith.addf %69, %70 : vector<2x256xf32>
    %72 = arith.mulf %71, %61 : vector<2x256xf32>
    %cst_34 = arith.constant 0.254829586 : f32
    %73 = vector.broadcast %cst_34 : f32 to vector<2x256xf32>
    %74 = arith.addf %72, %73 : vector<2x256xf32>
    %75 = arith.mulf %74, %61 : vector<2x256xf32>
    %cst_35 = arith.constant 0.000000e+00 : f32
    %76 = vector.broadcast %cst_35 : f32 to vector<2x256xf32>
    %77 = arith.subf %76, %55 : vector<2x256xf32>
    %78 = arith.mulf %77, %55 : vector<2x256xf32>
    %79 = math.exp %78 : vector<2x256xf32>
    %80 = arith.mulf %75, %79 : vector<2x256xf32>
    %cst_36 = arith.constant 1.000000e+00 : f32
    %81 = vector.broadcast %cst_36 : f32 to vector<2x256xf32>
    %82 = arith.subf %81, %80 : vector<2x256xf32>
    %cst_37 = arith.constant 0.000000e+00 : f32
    %83 = vector.broadcast %cst_37 : f32 to vector<2x256xf32>
    %84 = arith.cmpf olt, %54, %83 : vector<2x256xf32>
    %cst_38 = arith.constant 0.000000e+00 : f32
    %85 = vector.broadcast %cst_38 : f32 to vector<2x256xf32>
    %86 = arith.subf %85, %82 : vector<2x256xf32>
    %87 = arith.select %84, %86, %82 : vector<2x256xi1>, vector<2x256xf32>
    %cst_39 = arith.constant 1.000000e+00 : f32
    %88 = vector.broadcast %cst_39 : f32 to vector<2x256xf32>
    %89 = arith.addf %88, %87 : vector<2x256xf32>
    %90 = arith.mulf %52, %89 : vector<2x256xf32>
    %c0_40 = arith.constant 0 : index
    %c0_41 = arith.constant 0 : index
    %91 = vector.load %arg6[%c0_40, %c0_41] : memref<256x128xf32, #tpu.memory_space<vmem>>, vector<256x128xf32>
    %cst_42 = arith.constant dense<0.000000e+00> : vector<2x128xf32>
    %92 = tpu.matmul %90, %91, %cst_42 {dimension_numbers = #tpu.dot_dimension_numbers<[1], [0], [0], [1], [0, 0, 1, 1], [], []>} : vector<2x256xf32>, vector<256x128xf32>, vector<2x128xf32> -> vector<2x128xf32>
    %c0_43 = arith.constant 0 : index
    %c0_44 = arith.constant 0 : index
    %93 = vector.load %arg7[%c0_43, %c0_44] : memref<1x128xf32, #tpu.memory_space<vmem>>, vector<1x128xf32>
    %94 = vector.broadcast %93 : vector<1x128xf32> to vector<2x128xf32>
    %95 = arith.addf %92, %94 : vector<2x128xf32>
    %cst_45 = arith.constant 5.000000e-01 : f32
    %96 = vector.broadcast %cst_45 : f32 to vector<2x128xf32>
    %97 = arith.mulf %96, %95 : vector<2x128xf32>
    %cst_46 = arith.constant 0.707106769 : f32
    %98 = vector.broadcast %cst_46 : f32 to vector<2x128xf32>
    %99 = arith.mulf %95, %98 : vector<2x128xf32>
    %100 = math.absf %99 : vector<2x128xf32>
    %cst_47 = arith.constant 0.327591091 : f32
    %101 = vector.broadcast %cst_47 : f32 to vector<2x128xf32>
    %102 = arith.mulf %101, %100 : vector<2x128xf32>
    %cst_48 = arith.constant 1.000000e+00 : f32
    %103 = vector.broadcast %cst_48 : f32 to vector<2x128xf32>
    %104 = arith.addf %103, %102 : vector<2x128xf32>
    %cst_49 = arith.constant 1.000000e+00 : f32
    %105 = vector.broadcast %cst_49 : f32 to vector<2x128xf32>
    %106 = arith.divf %105, %104 : vector<2x128xf32>
    %cst_50 = arith.constant 1.06140542 : f32
    %107 = vector.broadcast %cst_50 : f32 to vector<2x128xf32>
    %108 = arith.mulf %107, %106 : vector<2x128xf32>
    %cst_51 = arith.constant -1.45315206 : f32
    %109 = vector.broadcast %cst_51 : f32 to vector<2x128xf32>
    %110 = arith.addf %108, %109 : vector<2x128xf32>
    %111 = arith.mulf %110, %106 : vector<2x128xf32>
    %cst_52 = arith.constant 1.42141378 : f32
    %112 = vector.broadcast %cst_52 : f32 to vector<2x128xf32>
    %113 = arith.addf %111, %112 : vector<2x128xf32>
    %114 = arith.mulf %113, %106 : vector<2x128xf32>
    %cst_53 = arith.constant -0.284496725 : f32
    %115 = vector.broadcast %cst_53 : f32 to vector<2x128xf32>
    %116 = arith.addf %114, %115 : vector<2x128xf32>
    %117 = arith.mulf %116, %106 : vector<2x128xf32>
    %cst_54 = arith.constant 0.254829586 : f32
    %118 = vector.broadcast %cst_54 : f32 to vector<2x128xf32>
    %119 = arith.addf %117, %118 : vector<2x128xf32>
    %120 = arith.mulf %119, %106 : vector<2x128xf32>
    %cst_55 = arith.constant 0.000000e+00 : f32
    %121 = vector.broadcast %cst_55 : f32 to vector<2x128xf32>
    %122 = arith.subf %121, %100 : vector<2x128xf32>
    %123 = arith.mulf %122, %100 : vector<2x128xf32>
    %124 = math.exp %123 : vector<2x128xf32>
    %125 = arith.mulf %120, %124 : vector<2x128xf32>
    %cst_56 = arith.constant 1.000000e+00 : f32
    %126 = vector.broadcast %cst_56 : f32 to vector<2x128xf32>
    %127 = arith.subf %126, %125 : vector<2x128xf32>
    %cst_57 = arith.constant 0.000000e+00 : f32
    %128 = vector.broadcast %cst_57 : f32 to vector<2x128xf32>
    %129 = arith.cmpf olt, %99, %128 : vector<2x128xf32>
    %cst_58 = arith.constant 0.000000e+00 : f32
    %130 = vector.broadcast %cst_58 : f32 to vector<2x128xf32>
    %131 = arith.subf %130, %127 : vector<2x128xf32>
    %132 = arith.select %129, %131, %127 : vector<2x128xi1>, vector<2x128xf32>
    %cst_59 = arith.constant 1.000000e+00 : f32
    %133 = vector.broadcast %cst_59 : f32 to vector<2x128xf32>
    %134 = arith.addf %133, %132 : vector<2x128xf32>
    %135 = arith.mulf %97, %134 : vector<2x128xf32>
    %c0_60 = arith.constant 0 : index
    %c0_61 = arith.constant 0 : index
    %136 = vector.load %arg8[%c0_60, %c0_61] : memref<128x128xf32, #tpu.memory_space<vmem>>, vector<128x128xf32>
    %cst_62 = arith.constant dense<0.000000e+00> : vector<2x128xf32>
    %137 = tpu.matmul %135, %136, %cst_62 {dimension_numbers = #tpu.dot_dimension_numbers<[1], [0], [0], [1], [0, 0, 1, 1], [], []>} : vector<2x128xf32>, vector<128x128xf32>, vector<2x128xf32> -> vector<2x128xf32>
    %c0_63 = arith.constant 0 : index
    %c0_64 = arith.constant 0 : index
    %138 = vector.load %arg9[%c0_63, %c0_64] : memref<1x128xf32, #tpu.memory_space<vmem>>, vector<1x128xf32>
    %139 = vector.broadcast %138 : vector<1x128xf32> to vector<2x128xf32>
    %140 = arith.addf %137, %139 : vector<2x128xf32>
    %cst_65 = arith.constant 0.000000e+00 : f32
    %141 = vector.broadcast %cst_65 : f32 to vector<2x128xf32>
    %142 = arith.subf %141, %140 : vector<2x128xf32>
    %143 = math.exp %142 : vector<2x128xf32>
    %cst_66 = arith.constant 1.000000e+00 : f32
    %144 = vector.broadcast %cst_66 : f32 to vector<2x128xf32>
    %145 = arith.addf %144, %143 : vector<2x128xf32>
    %cst_67 = arith.constant 1.000000e+00 : f32
    %146 = vector.broadcast %cst_67 : f32 to vector<2x128xf32>
    %147 = arith.divf %146, %145 : vector<2x128xf32>
    %c0_68 = arith.constant 0 : index
    %c0_69 = arith.constant 0 : index
    %148 = vector.load %arg10[%c0_68, %c0_69] : memref<2x128xf32, #tpu.memory_space<vmem>>, vector<2x128xf32>
    tpu.vector_store %arg10[%c0_68, %c0_69], %147 {strides = array<i32>} : memref<2x128xf32, #tpu.memory_space<vmem>>, vector<2x128xf32>,
    return
  }
  func.func @transform_0(%arg0: i32) -> (i32, i32) {
    %c0_i32 = arith.constant 0 : i32
    %c0_i32_0 = arith.constant 0 : i32
    return %arg0, %c0_i32 : i32, i32
  }
  func.func @transform_1(%arg0: i32) -> (i32, i32) {
    %c0_i32 = arith.constant 0 : i32
    %c0_i32_0 = arith.constant 0 : i32
    %c0_i32_1 = arith.constant 0 : i32
    return %c0_i32, %c0_i32_0 : i32, i32
  }
  func.func @transform_2(%arg0: i32) -> (i32, i32) {
    %c0_i32 = arith.constant 0 : i32
    %c0_i32_0 = arith.constant 0 : i32
    %c0_i32_1 = arith.constant 0 : i32
    return %c0_i32, %c0_i32_0 : i32, i32
  }
  func.func @transform_3(%arg0: i32) -> (i32, i32) {
    %c0_i32 = arith.constant 0 : i32
    %c0_i32_0 = arith.constant 0 : i32
    %c0_i32_1 = arith.constant 0 : i32
    return %c0_i32, %c0_i32_0 : i32, i32
  }
  func.func @transform_4(%arg0: i32) -> (i32, i32) {
    %c0_i32 = arith.constant 0 : i32
    %c0_i32_0 = arith.constant 0 : i32
    %c0_i32_1 = arith.constant 0 : i32
    return %c0_i32, %c0_i32_0 : i32, i32
  }
  func.func @transform_5(%arg0: i32) -> (i32, i32) {
    %c0_i32 = arith.constant 0 : i32
    %c0_i32_0 = arith.constant 0 : i32
    %c0_i32_1 = arith.constant 0 : i32
    return %c0_i32, %c0_i32_0 : i32, i32
  }
  func.func @transform_6(%arg0: i32) -> (i32, i32) {
    %c0_i32 = arith.constant 0 : i32
    %c0_i32_0 = arith.constant 0 : i32
    %c0_i32_1 = arith.constant 0 : i32
    return %c0_i32, %c0_i32_0 : i32, i32
  }
  func.func @transform_7(%arg0: i32) -> (i32, i32) {
    %c0_i32 = arith.constant 0 : i32
    %c0_i32_0 = arith.constant 0 : i32
    %c0_i32_1 = arith.constant 0 : i32
    return %c0_i32, %c0_i32_0 : i32, i32
  }
  func.func @transform_8(%arg0: i32) -> (i32, i32) {
    %c0_i32 = arith.constant 0 : i32
    %c0_i32_0 = arith.constant 0 : i32
    %c0_i32_1 = arith.constant 0 : i32
    return %c0_i32, %c0_i32_0 : i32, i32
  }
  func.func @transform_9(%arg0: i32) -> (i32, i32) {
    %c0_i32 = arith.constant 0 : i32
    %c0_i32_0 = arith.constant 0 : i32
    return %arg0, %c0_i32 : i32, i32
  }
}

</mosaic_0001>

<llo_original>
// kernel: convnet2d_forward.1
$region0: #{convnet2d_forward.1}
  #allocation0 [shape = 'u32[]', space=smem, size = 0x4, offset = 0x4, fixed_abs, tag = 'smem constant byte address 0x4 - core index']
  #allocation1 [shape = 'u32[72,128]{1,0:T(1,128)}', space=vmem, size = 0x9000, scoped, tag = 'internal scratch']
  %s0 = inlined_call_operand.vmem [shape: f32[2,64], index: 0, kind: input, shape index: {}]
  %s1 = inlined_call_operand.hbm [shape: f32[64,128], index: 1, kind: input, shape index: {}]
  %s2 = inlined_call_operand.vmem [shape: f32[1,128], index: 2, kind: input, shape index: {}]
  %s3 = inlined_call_operand.hbm [shape: f32[128,256], index: 3, kind: input, shape index: {}]
  %s4 = inlined_call_operand.vmem [shape: f32[1,256], index: 4, kind: input, shape index: {}]
  %s5 = inlined_call_operand.hbm [shape: f32[256,128], index: 5, kind: input, shape index: {}]
  %s6 = inlined_call_operand.vmem [shape: f32[1,128], index: 6, kind: input, shape index: {}]
  %s7 = inlined_call_operand.hbm [shape: f32[128,128], index: 7, kind: input, shape index: {}]
  %s8 = inlined_call_operand.vmem [shape: f32[1,128], index: 8, kind: input, shape index: {}]
  %s9 = inlined_call_operand.vmem [shape: f32[2,128], index: 9, kind: output, shape index: {}]
  %s10 = sld [smem:[#allocation0]]
  $region62: #{convnet2d_forward.1} parent=0
    _
  %s12 = ssub.s32 1, %s10
  %s13 = scalar_select 0, %s12, %s10
  $region1: #{convnet2d_forward.1} parent=0
    #allocation2 [shape = 'u8[32768]{0}', space=vmem, size = 0x8000, scoped, tag = 'input window, operand 1, single buffered']
    #allocation3 [shape = 's32[1]{0}', space=sflag, size = 0x4, scoped, tag = 'scoped memory for convnet2d_forward.1']
    #allocation4 [shape = 'u8[131072]{0}', space=vmem, size = 0x20000, scoped, tag = 'input window, operand 3, single buffered']
    #allocation5 [shape = 's32[1]{0}', space=sflag, size = 0x4, scoped, tag = 'scoped memory for convnet2d_forward.1']
    #allocation6 [shape = 'u8[131072]{0}', space=vmem, size = 0x20000, scoped, tag = 'input window, operand 5, single buffered']
    #allocation7 [shape = 'u8[65536]{0}', space=vmem, size = 0x10000, scoped, tag = 'input window, operand 7, single buffered']
    #allocation8 [shape = 's32[1]{0}', space=sflag, size = 0x4, scoped, tag = 'scoped memory for convnet2d_forward.1']
    %14 = vsyncpa [#allocation3], 0
    %15 = vsyncpa [#allocation5], 0
    %16 = vsyncpa [#allocation8], 0
    // Predicated region
    $region2: #{convnet2d_forward.1} parent=1 // pred_check
      _
    $region3: #{convnet2d_forward.1} parent=1 // pred_check_branch
      %18 = sbr.rel (0) target = $region5
    $region4: #{convnet2d_forward.1} parent=1 // pred_region
      _
    $region5: #{convnet2d_forward.1} parent=1 // pred_fallthru
      _
    // Predicated region
    $region6: #{convnet2d_forward.1} parent=1 // pred_check
      _
    $region7: #{convnet2d_forward.1} parent=1 // pred_check_branch
      %20 = sbr.rel (0) target = $region9
    $region8: #{convnet2d_forward.1} parent=1 // pred_region
      %22 = vsyncadd [#allocation3], 0
      %s23 = sshll.u32 %s1, 4
      %s24 = int_to_ptr.hbm [resolvable:$true] %s23
      %s25 = sshll.u32 [#allocation2], 4
      %s26 = int_to_ptr.vmem [resolvable:$true] %s25
      %31 = dma.hbm_to_vmem [thread:$0]  %s24, 1024, %s26, [#allocation3], 128, 128, 8
    $region9: #{convnet2d_forward.1} parent=1 // pred_fallthru
      _
    // Predicated region
    $region10: #{convnet2d_forward.1} parent=1 // pred_check
      _
    $region11: #{convnet2d_forward.1} parent=1 // pred_check_branch
      %33 = sbr.rel (0) target = $region13
    $region12: #{convnet2d_forward.1} parent=1 // pred_region
      _
    $region13: #{convnet2d_forward.1} parent=1 // pred_fallthru
      _
    // Predicated region
    $region14: #{convnet2d_forward.1} parent=1 // pred_check
      _
    $region15: #{convnet2d_forward.1} parent=1 // pred_check_branch
      %35 = sbr.rel (0) target = $region17
    $region16: #{convnet2d_forward.1} parent=1 // pred_region
      %37 = vsyncadd [#allocation5], 0
      %s38 = sshll.u32 %s3, 4
      %s39 = int_to_ptr.hbm [resolvable:$true] %s38
      %s40 = sshll.u32 [#allocation4], 4
      %s41 = int_to_ptr.vmem [resolvable:$true] %s40
      %46 = dma.hbm_to_vmem [thread:$0]  %s39, 4096, %s41, [#allocation5], 256, 256, 16
    $region17: #{convnet2d_forward.1} parent=1 // pred_fallthru
      _
    // Predicated region
    $region18: #{convnet2d_forward.1} parent=1 // pred_check
      _
    $region19: #{convnet2d_forward.1} parent=1 // pred_check_branch
      %48 = sbr.rel (0) target = $region21
    $region20: #{convnet2d_forward.1} parent=1 // pred_region
      _
    $region21: #{convnet2d_forward.1} parent=1 // pred_fallthru
      _
    // Predicated region
    $region22: #{convnet2d_forward.1} parent=1 // pred_check
      _
    $region23: #{convnet2d_forward.1} parent=1 // pred_check_branch
      %50 = sbr.rel (0) target = $region25
    $region24: #{convnet2d_forward.1} parent=1 // pred_region
      %52 = vsyncadd [#allocation5], 0
      %s53 = sshll.u32 %s5, 4
      %s54 = int_to_ptr.hbm [resolvable:$true] %s53
      %s55 = sshll.u32 [#allocation6], 4
      %s56 = int_to_ptr.vmem [resolvable:$true] %s55
      %61 = dma.hbm_to_vmem [thread:$0]  %s54, 4096, %s56, [#allocation5], 128, 128, 8
    $region25: #{convnet2d_forward.1} parent=1 // pred_fallthru
      _
    // Predicated region
    $region26: #{convnet2d_forward.1} parent=1 // pred_check
      _
    $region27: #{convnet2d_forward.1} parent=1 // pred_check_branch
      %63 = sbr.rel (0) target = $region29
    $region28: #{convnet2d_forward.1} parent=1 // pred_region
      _
    $region29: #{convnet2d_forward.1} parent=1 // pred_fallthru
      _
    // Predicated region
    $region30: #{convnet2d_forward.1} parent=1 // pred_check
      _
    $region31: #{convnet2d_forward.1} parent=1 // pred_check_branch
      %65 = sbr.rel (0) target = $region33
    $region32: #{convnet2d_forward.1} parent=1 // pred_region
      %67 = vsyncadd [#allocation8], 0
      %s68 = sshll.u32 %s7, 4
      %s69 = int_to_ptr.hbm [resolvable:$true] %s68
      %s70 = sshll.u32 [#allocation7], 4
      %s71 = int_to_ptr.vmem [resolvable:$true] %s70
      %76 = dma.hbm_to_vmem [thread:$0]  %s69, 2048, %s71, [#allocation8], 128, 128, 8
    $region33: #{convnet2d_forward.1} parent=1 // pred_fallthru
      _
    // Predicated region
    $region34: #{convnet2d_forward.1} parent=1 // pred_check
      _
    $region35: #{convnet2d_forward.1} parent=1 // pred_check_branch
      %78 = sbr.rel (0) target = $region37
    $region36: #{convnet2d_forward.1} parent=1 // pred_region
      _
    $region37: #{convnet2d_forward.1} parent=1 // pred_fallthru
      _
    // Predicated region
    $region38: #{convnet2d_forward.1} parent=1 // pred_check
      _
    $region39: #{convnet2d_forward.1} parent=1 // pred_check_branch
      %80 = sbr.rel (0) target = $region41
    $region40: #{convnet2d_forward.1} parent=1 // pred_region
      %82 = dma.done [#allocation3], 1024
    $region41: #{convnet2d_forward.1} parent=1 // pred_fallthru
      _
    // Predicated region
    $region42: #{convnet2d_forward.1} parent=1 // pred_check
      _
    $region43: #{convnet2d_forward.1} parent=1 // pred_check_branch
      %84 = sbr.rel (0) target = $region45
    $region44: #{convnet2d_forward.1} parent=1 // pred_region
      %86 = dma.done [#allocation5], 4096
    $region45: #{convnet2d_forward.1} parent=1 // pred_fallthru
      _
    // Predicated region
    $region46: #{convnet2d_forward.1} parent=1 // pred_check
      _
    $region47: #{convnet2d_forward.1} parent=1 // pred_check_branch
      %88 = sbr.rel (0) target = $region49
    $region48: #{convnet2d_forward.1} parent=1 // pred_region
      %90 = dma.done [#allocation5], 4096
    $region49: #{convnet2d_forward.1} parent=1 // pred_fallthru
      _
    // Predicated region
    $region50: #{convnet2d_forward.1} parent=1 // pred_check
      _
    $region51: #{convnet2d_forward.1} parent=1 // pred_check_branch
      %92 = sbr.rel (0) target = $region53
    $region52: #{convnet2d_forward.1} parent=1 // pred_region
      %94 = dma.done [#allocation8], 2048
    $region53: #{convnet2d_forward.1} parent=1 // pred_fallthru
      _
    %v95 = vld [vmem:[%s0] sm:$0x3]
    %v96 = vld [vmem:[#allocation2] sm:$0xff]
    %v97 = vld [vmem:[#allocation2 + $0x8] sm:$0xff]
    %v98 = vld [vmem:[#allocation2 + $0x10] sm:$0xff]
    %v99 = vld [vmem:[#allocation2 + $0x18] sm:$0xff]
    %v100 = vld [vmem:[#allocation2 + $0x20] sm:$0xff]
    %v101 = vld [vmem:[#allocation2 + $0x28] sm:$0xff]
    %v102 = vld [vmem:[#allocation2 + $0x30] sm:$0xff]
    %v103 = vld [vmem:[#allocation2 + $0x38] sm:$0xff]
    %v104 = vld [vmem:[%s2] sm:$0x1]
    %v106 = vperm.slane %v104, 0
    %vm108 = vcmask 523264
    %v110 = vsel %vm108, %v95, 0
    %112 = vmatpush.msra.mxu0 0.0
    %113 = vmatpush.msra.mxu0 0.0
    %114 = vmatpush.msra.mxu0 0.0
    %115 = vmatpush.msra.mxu0 0.0
    %116 = vmatpush.msra.mxu0 0.0
    %117 = vmatpush.msra.mxu0 0.0
    %118 = vmatpush.msra.mxu0 0.0
    %119 = vmatpush.msra.mxu0 0.0
    %120 = vmatpush.msra.mxu0 %v103
    %121 = vmatpush.msra.mxu0 %v102
    %122 = vmatpush.msra.mxu0 %v101
    %123 = vmatpush.msra.mxu0 %v100
    %124 = vmatpush.msra.mxu0 %v99
    %125 = vmatpush.msra.mxu0 %v98
    %126 = vmatpush.msra.mxu0 %v97
    %127 = vmatpush.msra.mxu0 %v96
    %128 = vmatmul.f32.gmra.mxu0 %v110
    %v129 = vpop.f32.mrf.mxu0
    %v130 = vadd.f32 %v106, %v129
    %131 = vdwg.mxu0
    %v132 = vmul.f32 %v130, 0.5
    %v133 = vmul.f32 %v130, 0.70710677
    %v134 = vand.u32 2147483647, %v133
    %v135 = vmul.f32 %v134, 0.3275911
    %v136 = vadd.f32 %v135, 1.0
    %v137 = vrcp.pop %v136
    %v138 = vmul.f32 %v136, %v137
    %v139 = vsub.f32 1.0, %v138
    %v140 = vmul.f32 %v137, %v139
    %v141 = vadd.f32 %v137, %v140
    %vm142 = vweird.f32 %v136
    %vm143 = vweird.f32 %v137
    %vm144 = vmor %vm142, %vm143
    %v145 = vsel %vm144, %v137, %v141
    %v146 = vand.u32 2147483647, %v136
    %vm147 = vcmp.eq.f32.partialorder %v146, 8.507059e+37
    %v148 = vand.u32 %v136, 2147483648
    %v149 = vor.u32 1.1754944e-38, %v148
    %v150 = vsel %vm147, %v149, %v145
    %v151 = vmul.f32 1.0, %v150
    %v152 = vmul.f32 %v151, 1.0614054
    %v153 = vadd.f32 %v152, -1.4531521
    %v154 = vmul.f32 %v153, %v151
    %v155 = vadd.f32 %v154, 1.4214138
    %v156 = vmul.f32 %v155, %v151
    %v157 = vadd.f32 %v156, -0.28449672
    %v158 = vmul.f32 %v157, %v151
    %v159 = vadd.f32 %v158, 0.2548296
    %v160 = vmul.f32 %v159, %v151
    %v161 = vsub.f32 0.0, %v134
    %v162 = vmul.f32 %v161, %v134
    %v163 = vmul.f32 %v162, 1.442695
    %v164 = vpow.pop %v163
    %v165 = vmul.f32 %v160, %v164
    %v166 = vsub.f32 1.0, %v165
    %vm167 = vcmp.lt.f32.partialorder %v133, 0.0
    %v168 = vsub.f32 0.0, %v166
    %v169 = vsel %vm167, %v168, %v166
    %v170 = vadd.f32 %v169, 1.0
    %v171 = vmul.f32 %v132, %v170
    %v172 = vld [vmem:[#allocation4] sm:$0xff]
    %v173 = vld [vmem:[#allocation4 + $0x8] sm:$0xff]
    %v174 = vld [vmem:[#allocation4 + $0x10] sm:$0xff]
    %v175 = vld [vmem:[#allocation4 + $0x18] sm:$0xff]
    %v176 = vld [vmem:[#allocation4 + $0x20] sm:$0xff]
    %v177 = vld [vmem:[#allocation4 + $0x28] sm:$0xff]
    %v178 = vld [vmem:[#allocation4 + $0x30] sm:$0xff]
    %v179 = vld [vmem:[#allocation4 + $0x38] sm:$0xff]
    %v180 = vld [vmem:[#allocation4 + $0x40] sm:$0xff]
    %v181 = vld [vmem:[#allocation4 + $0x48] sm:$0xff]
    %v182 = vld [vmem:[#allocation4 + $0x50] sm:$0xff]
    %v183 = vld [vmem:[#allocation4 + $0x58] sm:$0xff]
    %v184 = vld [vmem:[#allocation4 + $0x60] sm:$0xff]
    %v185 = vld [vmem:[#allocation4 + $0x68] sm:$0xff]
    %v186 = vld [vmem:[#allocation4 + $0x70] sm:$0xff]
    %v187 = vld [vmem:[#allocation4 + $0x78] sm:$0xff]
    %v188 = vld [vmem:[#allocation4 + $0x80] sm:$0xff]
    %v189 = vld [vmem:[#allocation4 + $0x88] sm:$0xff]
    %v190 = vld [vmem:[#allocation4 + $0x90] sm:$0xff]
    %v191 = vld [vmem:[#allocation4 + $0x98] sm:$0xff]
    %v192 = vld [vmem:[#allocation4 + $0xa0] sm:$0xff]
    %v193 = vld [vmem:[#allocation4 + $0xa8] sm:$0xff]
    %v194 = vld [vmem:[#allocation4 + $0xb0] sm:$0xff]
    %v195 = vld [vmem:[#allocation4 + $0xb8] sm:$0xff]
    %v196 = vld [vmem:[#allocation4 + $0xc0] sm:$0xff]
    %v197 = vld [vmem:[#allocation4 + $0xc8] sm:$0xff]
    %v198 = vld [vmem:[#allocation4 + $0xd0] sm:$0xff]
    %v199 = vld [vmem:[#allocation4 + $0xd8] sm:$0xff]
    %v200 = vld [vmem:[#allocation4 + $0xe0] sm:$0xff]
    %v201 = vld [vmem:[#allocation4 + $0xe8] sm:$0xff]
    %v202 = vld [vmem:[#allocation4 + $0xf0] sm:$0xff]
    %v203 = vld [vmem:[#allocation4 + $0xf8] sm:$0xff]
    %v204 = vld [vmem:[%s4] sm:$0x3]
    %v206 = vperm.slane %v204, 0
    %v207 = vperm.slane %v204, 1
    %210 = vmatpush.msra.mxu0 %v202
    %211 = vmatpush.msra.mxu0 %v200
    %212 = vmatpush.msra.mxu0 %v198
    %213 = vmatpush.msra.mxu0 %v196
    %214 = vmatpush.msra.mxu0 %v194
    %215 = vmatpush.msra.mxu0 %v192
    %216 = vmatpush.msra.mxu0 %v190
    %217 = vmatpush.msra.mxu0 %v188
    %218 = vmatpush.msra.mxu0 %v186
    %219 = vmatpush.msra.mxu0 %v184
    %220 = vmatpush.msra.mxu0 %v182
    %221 = vmatpush.msra.mxu0 %v180
    %222 = vmatpush.msra.mxu0 %v178
    %223 = vmatpush.msra.mxu0 %v176
    %224 = vmatpush.msra.mxu0 %v174
    %225 = vmatpush.msra.mxu0 %v172
    %226 = vmatmul.f32.gmra.mxu0 %v171
    %v227 = vpop.f32.mrf.mxu0
    %v228 = vadd.f32 %v206, %v227
    %229 = vdwg.mxu0
    %230 = vmatpush.msra.mxu0 %v203
    %231 = vmatpush.msra.mxu0 %v201
    %232 = vmatpush.msra.mxu0 %v199
    %233 = vmatpush.msra.mxu0 %v197
    %234 = vmatpush.msra.mxu0 %v195
    %235 = vmatpush.msra.mxu0 %v193
    %236 = vmatpush.msra.mxu0 %v191
    %237 = vmatpush.msra.mxu0 %v189
    %238 = vmatpush.msra.mxu0 %v187
    %239 = vmatpush.msra.mxu0 %v185
    %240 = vmatpush.msra.mxu0 %v183
    %241 = vmatpush.msra.mxu0 %v181
    %242 = vmatpush.msra.mxu0 %v179
    %243 = vmatpush.msra.mxu0 %v177
    %244 = vmatpush.msra.mxu0 %v175
    %245 = vmatpush.msra.mxu0 %v173
    %246 = vmatmul.f32.gmra.mxu0 %v171
    %v247 = vpop.f32.mrf.mxu0
    %v248 = vadd.f32 %v207, %v247
    %249 = vdwg.mxu0
    %v250 = vmul.f32 %v228, 0.5
    %v251 = vmul.f32 %v248, 0.5
    %v252 = vmul.f32 %v228, 0.70710677
    %v253 = vmul.f32 %v248, 0.70710677
    %v254 = vand.u32 2147483647, %v252
    %v255 = vand.u32 2147483647, %v253
    %v256 = vmul.f32 %v254, 0.3275911
    %v257 = vmul.f32 %v255, 0.3275911
    %v258 = vadd.f32 %v256, 1.0
    %v259 = vadd.f32 %v257, 1.0
    %v260 = vrcp.pop %v258
    %v261 = vmul.f32 %v258, %v260
    %v262 = vsub.f32 1.0, %v261
    %v263 = vmul.f32 %v260, %v262
    %v264 = vadd.f32 %v260, %v263
    %vm265 = vweird.f32 %v258
    %vm266 = vweird.f32 %v260
    %vm267 = vmor %vm265, %vm266
    %v268 = vsel %vm267, %v260, %v264
    %v269 = vand.u32 2147483647, %v258
    %vm270 = vcmp.eq.f32.partialorder %v269, 8.507059e+37
    %v271 = vand.u32 %v258, 2147483648
    %v272 = vor.u32 1.1754944e-38, %v271
    %v273 = vsel %vm270, %v272, %v268
    %v274 = vmul.f32 1.0, %v273
    %v275 = vrcp.pop %v259
    %v276 = vmul.f32 %v259, %v275
    %v277 = vsub.f32 1.0, %v276
    %v278 = vmul.f32 %v275, %v277
    %v279 = vadd.f32 %v275, %v278
    %vm280 = vweird.f32 %v259
    %vm281 = vweird.f32 %v275
    %vm282 = vmor %vm280, %vm281
    %v283 = vsel %vm282, %v275, %v279
    %v284 = vand.u32 2147483647, %v259
    %vm285 = vcmp.eq.f32.partialorder %v284, 8.507059e+37
    %v286 = vand.u32 %v259, 2147483648
    %v287 = vor.u32 1.1754944e-38, %v286
    %v288 = vsel %vm285, %v287, %v283
    %v289 = vmul.f32 1.0, %v288
    %v290 = vmul.f32 %v274, 1.0614054
    %v291 = vmul.f32 %v289, 1.0614054
    %v292 = vadd.f32 %v290, -1.4531521
    %v293 = vadd.f32 %v291, -1.4531521
    %v294 = vmul.f32 %v292, %v274
    %v295 = vmul.f32 %v293, %v289
    %v296 = vadd.f32 %v294, 1.4214138
    %v297 = vadd.f32 %v295, 1.4214138
    %v298 = vmul.f32 %v296, %v274
    %v299 = vmul.f32 %v297, %v289
    %v300 = vadd.f32 %v298, -0.28449672
    %v301 = vadd.f32 %v299, -0.28449672
    %v302 = vmul.f32 %v300, %v274
    %v303 = vmul.f32 %v301, %v289
    %v304 = vadd.f32 %v302, 0.2548296
    %v305 = vadd.f32 %v303, 0.2548296
    %v306 = vmul.f32 %v304, %v274
    %v307 = vmul.f32 %v305, %v289
    %v308 = vsub.f32 0.0, %v254
    %v309 = vsub.f32 0.0, %v255
    %v310 = vmul.f32 %v308, %v254
    %v311 = vmul.f32 %v309, %v255
    %v312 = vmul.f32 %v310, 1.442695
    %v313 = vpow.pop %v312
    %v314 = vmul.f32 %v311, 1.442695
    %v315 = vpow.pop %v314
    %v316 = vmul.f32 %v306, %v313
    %v317 = vmul.f32 %v307, %v315
    %v318 = vsub.f32 1.0, %v316
    %v319 = vsub.f32 1.0, %v317
    %vm320 = vcmp.lt.f32.partialorder %v252, 0.0
    %vm321 = vcmp.lt.f32.partialorder %v253, 0.0
    %v322 = vsub.f32 0.0, %v318
    %v323 = vsub.f32 0.0, %v319
    %v324 = vsel %vm320, %v322, %v318
    %v325 = vsel %vm321, %v323, %v319
    %v326 = vadd.f32 %v324, 1.0
    %v327 = vadd.f32 %v325, 1.0
    %v328 = vmul.f32 %v250, %v326
    %v329 = vmul.f32 %v251, %v327
    %v330 = vld [vmem:[#allocation6] sm:$0xff]
    %v331 = vld [vmem:[#allocation6 + $0x8] sm:$0xff]
    %v332 = vld [vmem:[#allocation6 + $0x10] sm:$0xff]
    %v333 = vld [vmem:[#allocation6 + $0x18] sm:$0xff]
    %v334 = vld [vmem:[#allocation6 + $0x20] sm:$0xff]
    %v335 = vld [vmem:[#allocation6 + $0x28] sm:$0xff]
    %v336 = vld [vmem:[#allocation6 + $0x30] sm:$0xff]
    %v337 = vld [vmem:[#allocation6 + $0x38] sm:$0xff]
    %v338 = vld [vmem:[#allocation6 + $0x40] sm:$0xff]
    %v339 = vld [vmem:[#allocation6 + $0x48] sm:$0xff]
    %v340 = vld [vmem:[#allocation6 + $0x50] sm:$0xff]
    %v341 = vld [vmem:[#allocation6 + $0x58] sm:$0xff]
    %v342 = vld [vmem:[#allocation6 + $0x60] sm:$0xff]
    %v343 = vld [vmem:[#allocation6 + $0x68] sm:$0xff]
    %v344 = vld [vmem:[#allocation6 + $0x70] sm:$0xff]
    %v345 = vld [vmem:[#allocation6 + $0x78] sm:$0xff]
    %v346 = vld [vmem:[#allocation6 + $0x80] sm:$0xff]
    %v347 = vld [vmem:[#allocation6 + $0x88] sm:$0xff]
    %v348 = vld [vmem:[#allocation6 + $0x90] sm:$0xff]
    %v349 = vld [vmem:[#allocation6 + $0x98] sm:$0xff]
    %v350 = vld [vmem:[#allocation6 + $0xa0] sm:$0xff]
    %v351 = vld [vmem:[#allocation6 + $0xa8] sm:$0xff]
    %v352 = vld [vmem:[#allocation6 + $0xb0] sm:$0xff]
    %v353 = vld [vmem:[#allocation6 + $0xb8] sm:$0xff]
    %v354 = vld [vmem:[#allocation6 + $0xc0] sm:$0xff]
    %v355 = vld [vmem:[#allocation6 + $0xc8] sm:$0xff]
    %v356 = vld [vmem:[#allocation6 + $0xd0] sm:$0xff]
    %v357 = vld [vmem:[#allocation6 + $0xd8] sm:$0xff]
    %v358 = vld [vmem:[#allocation6 + $0xe0] sm:$0xff]
    %v359 = vld [vmem:[#allocation6 + $0xe8] sm:$0xff]
    %v360 = vld [vmem:[#allocation6 + $0xf0] sm:$0xff]
    %v361 = vld [vmem:[#allocation6 + $0xf8] sm:$0xff]
    %v362 = vld [vmem:[%s6] sm:$0x1]
    %v364 = vperm.slane %v362, 0
    %366 = vmatpush.msra.mxu0 %v345
    %367 = vmatpush.msra.mxu0 %v344
    %368 = vmatpush.msra.mxu0 %v343
    %369 = vmatpush.msra.mxu0 %v342
    %370 = vmatpush.msra.mxu0 %v341
    %371 = vmatpush.msra.mxu0 %v340
    %372 = vmatpush.msra.mxu0 %v339
    %373 = vmatpush.msra.mxu0 %v338
    %374 = vmatpush.msra.mxu0 %v337
    %375 = vmatpush.msra.mxu0 %v336
    %376 = vmatpush.msra.mxu0 %v335
    %377 = vmatpush.msra.mxu0 %v334
    %378 = vmatpush.msra.mxu0 %v333
    %379 = vmatpush.msra.mxu0 %v332
    %380 = vmatpush.msra.mxu0 %v331
    %381 = vmatpush.msra.mxu0 %v330
    %382 = vmatmul.f32.gmra.mxu0 %v328
    %v383 = vpop.f32.mrf.mxu0
    %v384 = vadd.f32 %v364, %v383
    %385 = vdwg.mxu0
    %386 = vmatpush.msra.mxu0 %v361
    %387 = vmatpush.msra.mxu0 %v360
    %388 = vmatpush.msra.mxu0 %v359
    %389 = vmatpush.msra.mxu0 %v358
    %390 = vmatpush.msra.mxu0 %v357
    %391 = vmatpush.msra.mxu0 %v356
    %392 = vmatpush.msra.mxu0 %v355
    %393 = vmatpush.msra.mxu0 %v354
    %394 = vmatpush.msra.mxu0 %v353
    %395 = vmatpush.msra.mxu0 %v352
    %396 = vmatpush.msra.mxu0 %v351
    %397 = vmatpush.msra.mxu0 %v350
    %398 = vmatpush.msra.mxu0 %v349
    %399 = vmatpush.msra.mxu0 %v348
    %400 = vmatpush.msra.mxu0 %v347
    %401 = vmatpush.msra.mxu0 %v346
    %402 = vmatmul.f32.gmra.mxu0 %v329
    %v403 = vpop.f32.mrf.mxu0
    %v404 = vadd.f32 %v384, %v403
    %405 = vdwg.mxu0
    %v406 = vmul.f32 %v404, 0.5
    %v407 = vmul.f32 %v404, 0.70710677
    %v408 = vand.u32 2147483647, %v407
    %v409 = vmul.f32 %v408, 0.3275911
    %v410 = vadd.f32 %v409, 1.0
    %v411 = vrcp.pop %v410
    %v412 = vmul.f32 %v410, %v411
    %v413 = vsub.f32 1.0, %v412
    %v414 = vmul.f32 %v411, %v413
    %v415 = vadd.f32 %v411, %v414
    %vm416 = vweird.f32 %v410
    %vm417 = vweird.f32 %v411
    %vm418 = vmor %vm416, %vm417
    %v419 = vsel %vm418, %v411, %v415
    %v420 = vand.u32 2147483647, %v410
    %vm421 = vcmp.eq.f32.partialorder %v420, 8.507059e+37
    %v422 = vand.u32 %v410, 2147483648
    %v423 = vor.u32 1.1754944e-38, %v422
    %v424 = vsel %vm421, %v423, %v419
    %v425 = vmul.f32 1.0, %v424
    %v426 = vmul.f32 %v425, 1.0614054
    %v427 = vadd.f32 %v426, -1.4531521
    %v428 = vmul.f32 %v427, %v425
    %v429 = vadd.f32 %v428, 1.4214138
    %v430 = vmul.f32 %v429, %v425
    %v431 = vadd.f32 %v430, -0.28449672
    %v432 = vmul.f32 %v431, %v425
    %v433 = vadd.f32 %v432, 0.2548296
    %v434 = vmul.f32 %v433, %v425
    %v435 = vsub.f32 0.0, %v408
    %v436 = vmul.f32 %v435, %v408
    %v437 = vmul.f32 %v436, 1.442695
    %v438 = vpow.pop %v437
    %v439 = vmul.f32 %v434, %v438
    %v440 = vsub.f32 1.0, %v439
    %vm441 = vcmp.lt.f32.partialorder %v407, 0.0
    %v442 = vsub.f32 0.0, %v440
    %v443 = vsel %vm441, %v442, %v440
    %v444 = vadd.f32 %v443, 1.0
    %v445 = vmul.f32 %v406, %v444
    %v446 = vld [vmem:[#allocation7] sm:$0xff]
    %v447 = vld [vmem:[#allocation7 + $0x8] sm:$0xff]
    %v448 = vld [vmem:[#allocation7 + $0x10] sm:$0xff]
    %v449 = vld [vmem:[#allocation7 + $0x18] sm:$0xff]
    %v450 = vld [vmem:[#allocation7 + $0x20] sm:$0xff]
    %v451 = vld [vmem:[#allocation7 + $0x28] sm:$0xff]
    %v452 = vld [vmem:[#allocation7 + $0x30] sm:$0xff]
    %v453 = vld [vmem:[#allocation7 + $0x38] sm:$0xff]
    %v454 = vld [vmem:[#allocation7 + $0x40] sm:$0xff]
    %v455 = vld [vmem:[#allocation7 + $0x48] sm:$0xff]
    %v456 = vld [vmem:[#allocation7 + $0x50] sm:$0xff]
    %v457 = vld [vmem:[#allocation7 + $0x58] sm:$0xff]
    %v458 = vld [vmem:[#allocation7 + $0x60] sm:$0xff]
    %v459 = vld [vmem:[#allocation7 + $0x68] sm:$0xff]
    %v460 = vld [vmem:[#allocation7 + $0x70] sm:$0xff]
    %v461 = vld [vmem:[#allocation7 + $0x78] sm:$0xff]
    %v462 = vld [vmem:[%s8] sm:$0x1]
    %v464 = vperm.slane %v462, 0
    %466 = vmatpush.msra.mxu0 %v461
    %467 = vmatpush.msra.mxu0 %v460
    %468 = vmatpush.msra.mxu0 %v459
    %469 = vmatpush.msra.mxu0 %v458
    %470 = vmatpush.msra.mxu0 %v457
    %471 = vmatpush.msra.mxu0 %v456
    %472 = vmatpush.msra.mxu0 %v455
    %473 = vmatpush.msra.mxu0 %v454
    %474 = vmatpush.msra.mxu0 %v453
    %475 = vmatpush.msra.mxu0 %v452
    %476 = vmatpush.msra.mxu0 %v451
    %477 = vmatpush.msra.mxu0 %v450
    %478 = vmatpush.msra.mxu0 %v449
    %479 = vmatpush.msra.mxu0 %v448
    %480 = vmatpush.msra.mxu0 %v447
    %481 = vmatpush.msra.mxu0 %v446
    %482 = vmatmul.f32.gmra.mxu0 %v445
    %v483 = vpop.f32.mrf.mxu0
    %v484 = vadd.f32 %v464, %v483
    %485 = vdwg.mxu0
    %v486 = vsub.f32 0.0, %v484
    %v487 = vmul.f32 %v486, 1.442695
    %v488 = vpow.pop %v487
    %v489 = vadd.f32 %v488, 1.0
    %v490 = vrcp.pop %v489
    %v491 = vmul.f32 %v489, %v490
    %v492 = vsub.f32 1.0, %v491
    %v493 = vmul.f32 %v490, %v492
    %v494 = vadd.f32 %v490, %v493
    %vm495 = vweird.f32 %v489
    %vm496 = vweird.f32 %v490
    %vm497 = vmor %vm495, %vm496
    %v498 = vsel %vm497, %v490, %v494
    %v499 = vand.u32 2147483647, %v489
    %vm500 = vcmp.eq.f32.partialorder %v499, 8.507059e+37
    %v501 = vand.u32 %v489, 2147483648
    %v502 = vor.u32 1.1754944e-38, %v501
    %v503 = vsel %vm500, %v502, %v498
    %v504 = vmul.f32 1.0, %v503
    %505 = vst [vmem:[%s9] sm:$0x3] %v504
    // Predicated region
    $region54: #{convnet2d_forward.1} parent=1 // pred_check
      _
    $region55: #{convnet2d_forward.1} parent=1 // pred_check_branch
      %507 = sbr.rel (0) target = $region57
    $region56: #{convnet2d_forward.1} parent=1 // pred_region
      _
    $region57: #{convnet2d_forward.1} parent=1 // pred_fallthru
      _
    // Predicated region
    $region58: #{convnet2d_forward.1} parent=1 // pred_check
      _
    $region59: #{convnet2d_forward.1} parent=1 // pred_check_branch
      %509 = sbr.rel (0) target = $region61
    $region60: #{convnet2d_forward.1} parent=1 // pred_region
      _
    $region61: #{convnet2d_forward.1} parent=1 // pred_fallthru
      _
    %510 = vsyncpa [#allocation3], 1
    %511 = vsyncpa [#allocation5], 1
    %512 = vsyncpa [#allocation8], 1

</llo_original>
